<compile_context>
chip_gen: v7x
topology: tpu7x:2x2x1
jax: 0.10.0
libtpu: 0.0.40
codegen_flags: <defaults>
</compile_context>

<pallas_src>
import math

import jax
import jax.numpy as jnp
from jax.experimental import pallas as pl
from jax.experimental.pallas import tpu as pltpu


def _round_up(x, m):
    return ((x + m - 1) // m) * m


def _make_transform_kernel(eps):
    inv_sqrt2 = 1.0 / math.sqrt(2.0)

    def kernel(x_ref, w_ref, b_ref, gamma_ref, beta_ref, o_ref):
        # x_ref: (TM, H) input rows, native dtype (f32 or bf16)
        # w_ref: (H_out, H_in) dense weight, native torch Linear layout
        # b_ref / gamma_ref / beta_ref: (1, H)
        x = x_ref[...]
        w = w_ref[...]

        # dense: y = x @ W^T + b ; contract last dims of both, f32 accumulation.
        y = jax.lax.dot_general(
            x, w,
            dimension_numbers=(((1,), (1,)), ((), ())),
            preferred_element_type=jnp.float32,
        )
        y = y + b_ref[...].astype(jnp.float32)

        # exact GELU (torch.nn.GELU default): 0.5 * y * (1 + erf(y / sqrt(2)))
        y = 0.5 * y * (1.0 + jax.lax.erf(y * inv_sqrt2))

        # LayerNorm over last dim (biased variance, like torch.nn.LayerNorm)
        mean = jnp.mean(y, axis=-1, keepdims=True)
        centered = y - mean
        var = jnp.mean(centered * centered, axis=-1, keepdims=True)
        inv = jax.lax.rsqrt(var + eps)
        out = (centered * inv) * gamma_ref[...].astype(jnp.float32) \
              + beta_ref[...].astype(jnp.float32)

        o_ref[...] = out.astype(o_ref.dtype)

    return kernel


def bert_prediction_head_transform(hidden_states, dense_w, dense_b, ln_gamma,
                                   ln_beta, layer_norm_eps, *, row_tile=512):
    """hidden_states: (B, S, H); dense_w: (H, H) torch Linear weight (out, in)."""
    B, S, H = hidden_states.shape
    N = B * S

    # MXU-aligned row tile: multiple of 8 sublanes, clamped for tiny inputs.
    # For real BERT shapes (N >= 512) this gives a 512-row (v5e/v6e/v7x friendly) tile.
    tm = min(row_tile, _round_up(N, 8))
    tm = max(8, (tm // 8) * 8)
    n_pad = _round_up(N, tm)

    x2d = hidden_states.reshape(N, H)
    if n_pad != N:
        x2d = jnp.pad(x2d, ((0, n_pad - N), (0, 0)))
    b2d = dense_b.reshape(1, H)
    gamma2d = ln_gamma.reshape(1, H)
    beta2d = ln_beta.reshape(1, H)

    in_bytes = jnp.dtype(hidden_states.dtype).itemsize
    w_bytes = jnp.dtype(dense_w.dtype).itemsize

    # VMEM budget: single-buffered params + double-buffered in/out row tiles
    # + f32 intermediates + headroom. Clamped to 64 MiB (v7x physical VMEM).
    vmem_needed = (H * H * w_bytes + 3 * H * in_bytes        # resident params
                   + 2 * 2 * tm * H * in_bytes               # x/out tiles, 2-deep
                   + 3 * tm * H * 4                          # f32 scratch
                   + (4 << 20))                              # headroom
    vmem_limit = int(min(max(_round_up(vmem_needed, 1 << 20), 16 << 20), 64 << 20))

    cost = pl.CostEstimate(
        flops=2 * n_pad * H * H + 12 * n_pad * H,
        transcendentals=n_pad * H,
        bytes_accessed=2 * n_pad * H * in_bytes + H * H * w_bytes + 3 * H * in_bytes,
    )

    # TODO(synk): add a K/N reduction grid axis for the weight when H*H no longer
    # fits VMEM (H >~ 2048 in f32); for standard BERT H (768/1024) it stays resident.
    invariant = dict(pipeline_mode=pl.Buffered(1))  # single VMEM copy, no re-DMA

    grid = (n_pad // tm,)
    out = pl.pallas_call(
        _make_transform_kernel(float(layer_norm_eps)),
        out_shape=jax.ShapeDtypeStruct((n_pad, H), hidden_states.dtype),
        grid_spec=pltpu.PrefetchScalarGridSpec(
            num_scalar_prefetch=0,
            grid=grid,
            in_specs=[
                pl.BlockSpec((tm, H), lambda i: (i, 0)),               # x rows
                pl.BlockSpec((H, H), lambda i: (0, 0), **invariant),   # weight (out,in)
                pl.BlockSpec((1, H), lambda i: (0, 0), **invariant),   # bias
                pl.BlockSpec((1, H), lambda i: (0, 0), **invariant),   # gamma
                pl.BlockSpec((1, H), lambda i: (0, 0), **invariant),   # beta
            ],
            out_specs=pl.BlockSpec((tm, H), lambda i: (i, 0)),
        ),
        compiler_params=pltpu.CompilerParams(
            dimension_semantics=("parallel",),
            vmem_limit_bytes=vmem_limit,
        ),
        cost_estimate=cost,
    )(x2d, dense_w, b2d, gamma2d, beta2d)

    if n_pad != N:
        out = out[:N]
    return out.reshape(B, S, H)


def _reference(hidden_states, dense_w, dense_b, ln_gamma, ln_beta, eps):
    y = jnp.einsum("bsh,oh->bso", hidden_states, dense_w) + dense_b
    y = 0.5 * y * (1.0 + jax.lax.erf(y / jnp.sqrt(2.0)))
    mean = jnp.mean(y, axis=-1, keepdims=True)
    var = jnp.mean((y - mean) ** 2, axis=-1, keepdims=True)
    return (y - mean) / jnp.sqrt(var + eps) * ln_gamma + ln_beta


if __name__ == "__main__":
    # Small BERT-like config: batch=2, seq=8, hidden=32, layer_norm_eps=1e-12.
    # (Real configs use H=768/1024 where the lane dim is 128-dense; this is just
    #  a correctness smoke test, not a perf shape.)
    B, S, H = 2, 8, 32
    eps = 1e-12

    key = jax.random.PRNGKey(0)
    k_x, k_w, k_b, k_g, k_beta = jax.random.split(key, 5)

    hidden_states = jax.random.normal(k_x, (B, S, H), dtype=jnp.float32)
    dense_w = jax.random.normal(k_w, (H, H), dtype=jnp.float32) * 0.05  # (out, in)
    dense_b = jax.random.normal(k_b, (H,), dtype=jnp.float32) * 0.05
    ln_gamma = 1.0 + 0.05 * jax.random.normal(k_g, (H,), dtype=jnp.float32)
    ln_beta = 0.05 * jax.random.normal(k_beta, (H,), dtype=jnp.float32)

    out = bert_prediction_head_transform(
        hidden_states, dense_w, dense_b, ln_gamma, ln_beta, eps)
    out = jax.block_until_ready(out)

    ref = _reference(hidden_states, dense_w, dense_b, ln_gamma, ln_beta, eps)
    assert out.shape == (B, S, H)
    assert jnp.allclose(out, ref, atol=1e-5, rtol=1e-5), "mismatch vs reference"

    print("KERNEL_OK")
</pallas_src>

<mosaic_0001>
module attributes {stable_mosaic.version = 11 : i64} {
  func.func @kernel(%arg0: i32, %arg1: memref<16x32xf32, #tpu.memory_space<vmem>>, %arg2: memref<32x32xf32, #tpu.memory_space<vmem>>, %arg3: memref<1x32xf32, #tpu.memory_space<vmem>>, %arg4: memref<1x32xf32, #tpu.memory_space<vmem>>, %arg5: memref<1x32xf32, #tpu.memory_space<vmem>>, %arg6: memref<16x32xf32, #tpu.memory_space<vmem>>) attributes {dimension_semantics = [#tpu.dimension_semantics<parallel>], iteration_bounds = array<i64: 1>, scalar_prefetch = 0 : i64, scratch_operands = 0 : i64, tpu.core_type = #tpu.core_type<tc>, window_params = [{transform_indices = @transform_0, window_bounds = array<i64: 16, 32>}, {pipeline_mode = #tpu.pipeline_mode<synchronous>, transform_indices = @transform_1, window_bounds = array<i64: 32, 32>}, {pipeline_mode = #tpu.pipeline_mode<synchronous>, transform_indices = @transform_2, window_bounds = array<i64: 1, 32>}, {pipeline_mode = #tpu.pipeline_mode<synchronous>, transform_indices = @transform_3, window_bounds = array<i64: 1, 32>}, {pipeline_mode = #tpu.pipeline_mode<synchronous>, transform_indices = @transform_4, window_bounds = array<i64: 1, 32>}, {transform_indices = @transform_5, window_bounds = array<i64: 16, 32>}]} {
    %c0 = arith.constant 0 : index
    %c0_0 = arith.constant 0 : index
    %0 = vector.load %arg1[%c0, %c0_0] : memref<16x32xf32, #tpu.memory_space<vmem>>, vector<16x32xf32>
    %c0_1 = arith.constant 0 : index
    %c0_2 = arith.constant 0 : index
    %1 = vector.load %arg2[%c0_1, %c0_2] : memref<32x32xf32, #tpu.memory_space<vmem>>, vector<32x32xf32>
    %cst = arith.constant dense<0.000000e+00> : vector<16x32xf32>
    %2 = tpu.matmul %0, %1, %cst {dimension_numbers = #tpu.dot_dimension_numbers<[1], [1], [0], [0], [0, 0, 1, 0], [], []>} : vector<16x32xf32>, vector<32x32xf32>, vector<16x32xf32> -> vector<16x32xf32>
    %c0_3 = arith.constant 0 : index
    %c0_4 = arith.constant 0 : index
    %3 = vector.load %arg3[%c0_3, %c0_4] : memref<1x32xf32, #tpu.memory_space<vmem>>, vector<1x32xf32>
    %4 = vector.broadcast %3 : vector<1x32xf32> to vector<16x32xf32>
    %5 = arith.addf %2, %4 : vector<16x32xf32>
    %cst_5 = arith.constant 5.000000e-01 : f32
    %6 = vector.broadcast %cst_5 : f32 to vector<16x32xf32>
    %7 = arith.mulf %6, %5 : vector<16x32xf32>
    %cst_6 = arith.constant 0.707106769 : f32
    %8 = vector.broadcast %cst_6 : f32 to vector<16x32xf32>
    %9 = arith.mulf %5, %8 : vector<16x32xf32>
    %10 = math.erf %9 : vector<16x32xf32>
    %cst_7 = arith.constant 1.000000e+00 : f32
    %11 = vector.broadcast %cst_7 : f32 to vector<16x32xf32>
    %12 = arith.addf %11, %10 : vector<16x32xf32>
    %13 = arith.mulf %7, %12 : vector<16x32xf32>
    %cst_8 = arith.constant dense<0.000000e+00> : vector<16xf32>
    %14 = vector.multi_reduction <add>, %13, %cst_8 [1] : vector<16x32xf32> to vector<16xf32>
    %15 = vector.shape_cast %14 : vector<16xf32> to vector<16x1xf32>
    %cst_9 = arith.constant 3.200000e+01 : f32
    %16 = vector.broadcast %cst_9 : f32 to vector<16x1xf32>
    %17 = arith.divf %15, %16 : vector<16x1xf32>
    %18 = vector.broadcast %17 : vector<16x1xf32> to vector<16x32xf32>
    %19 = arith.subf %13, %18 : vector<16x32xf32>
    %20 = arith.mulf %19, %19 : vector<16x32xf32>
    %cst_10 = arith.constant dense<0.000000e+00> : vector<16xf32>
    %21 = vector.multi_reduction <add>, %20, %cst_10 [1] : vector<16x32xf32> to vector<16xf32>
    %22 = vector.shape_cast %21 : vector<16xf32> to vector<16x1xf32>
    %cst_11 = arith.constant 3.200000e+01 : f32
    %23 = vector.broadcast %cst_11 : f32 to vector<16x1xf32>
    %24 = arith.divf %22, %23 : vector<16x1xf32>
    %cst_12 = arith.constant 9.99999996E-13 : f32
    %25 = vector.broadcast %cst_12 : f32 to vector<16x1xf32>
    %26 = arith.addf %24, %25 : vector<16x1xf32>
    %27 = math.rsqrt %26 : vector<16x1xf32>
    %28 = vector.broadcast %27 : vector<16x1xf32> to vector<16x32xf32>
    %29 = arith.mulf %19, %28 : vector<16x32xf32>
    %c0_13 = arith.constant 0 : index
    %c0_14 = arith.constant 0 : index
    %30 = vector.load %arg4[%c0_13, %c0_14] : memref<1x32xf32, #tpu.memory_space<vmem>>, vector<1x32xf32>
    %31 = vector.broadcast %30 : vector<1x32xf32> to vector<16x32xf32>
    %32 = arith.mulf %29, %31 : vector<16x32xf32>
    %c0_15 = arith.constant 0 : index
    %c0_16 = arith.constant 0 : index
    %33 = vector.load %arg5[%c0_15, %c0_16] : memref<1x32xf32, #tpu.memory_space<vmem>>, vector<1x32xf32>
    %34 = vector.broadcast %33 : vector<1x32xf32> to vector<16x32xf32>
    %35 = arith.addf %32, %34 : vector<16x32xf32>
    %c0_17 = arith.constant 0 : index
    %c0_18 = arith.constant 0 : index
    %36 = vector.load %arg6[%c0_17, %c0_18] : memref<16x32xf32, #tpu.memory_space<vmem>>, vector<16x32xf32>
    tpu.vector_store %arg6[%c0_17, %c0_18], %35 {strides = array<i32>} : memref<16x32xf32, #tpu.memory_space<vmem>>, vector<16x32xf32>,
    return
  }
  func.func @transform_0(%arg0: i32) -> (i32, i32) {
    %c0_i32 = arith.constant 0 : i32
    %c0_i32_0 = arith.constant 0 : i32
    return %arg0, %c0_i32 : i32, i32
  }
  func.func @transform_1(%arg0: i32) -> (i32, i32) {
    %c0_i32 = arith.constant 0 : i32
    %c0_i32_0 = arith.constant 0 : i32
    %c0_i32_1 = arith.constant 0 : i32
    return %c0_i32, %c0_i32_0 : i32, i32
  }
  func.func @transform_2(%arg0: i32) -> (i32, i32) {
    %c0_i32 = arith.constant 0 : i32
    %c0_i32_0 = arith.constant 0 : i32
    %c0_i32_1 = arith.constant 0 : i32
    return %c0_i32, %c0_i32_0 : i32, i32
  }
  func.func @transform_3(%arg0: i32) -> (i32, i32) {
    %c0_i32 = arith.constant 0 : i32
    %c0_i32_0 = arith.constant 0 : i32
    %c0_i32_1 = arith.constant 0 : i32
    return %c0_i32, %c0_i32_0 : i32, i32
  }
  func.func @transform_4(%arg0: i32) -> (i32, i32) {
    %c0_i32 = arith.constant 0 : i32
    %c0_i32_0 = arith.constant 0 : i32
    %c0_i32_1 = arith.constant 0 : i32
    return %c0_i32, %c0_i32_0 : i32, i32
  }
  func.func @transform_5(%arg0: i32) -> (i32, i32) {
    %c0_i32 = arith.constant 0 : i32
    %c0_i32_0 = arith.constant 0 : i32
    return %arg0, %c0_i32 : i32, i32
  }
}

</mosaic_0001>

<llo_original>
// kernel: tpu_custom_call.1
$region0: #{tpu_custom_call.1}
  #allocation0 [shape = 'u32[]', space=smem, size = 0x4, offset = 0x4, fixed_abs, tag = 'smem constant byte address 0x4 - core index']
  #allocation1 [shape = 'u32[144,128]{1,0:T(1,128)}', space=vmem, size = 0x12000, scoped, tag = 'internal scratch']
  %s0 = inlined_call_operand.hbm [shape: f32[16,32], index: 0, kind: input, shape index: {}]
  %s1 = inlined_call_operand.hbm [shape: f32[32,32], index: 1, kind: input, shape index: {}]
  %s2 = inlined_call_operand.vmem [shape: f32[1,32], index: 2, kind: input, shape index: {}]
  %s3 = inlined_call_operand.vmem [shape: f32[1,32], index: 3, kind: input, shape index: {}]
  %s4 = inlined_call_operand.vmem [shape: f32[1,32], index: 4, kind: input, shape index: {}]
  %s5 = inlined_call_operand.hbm [shape: f32[16,32], index: 5, kind: output, shape index: {}]
  %s6 = sld [smem:[#allocation0]]
  $region38: #{tpu_custom_call.1} parent=0
    _
  %s8 = ssub.s32 1, %s6
  %s9 = scalar_select 0, %s8, %s6
  $region1: #{tpu_custom_call.1} parent=0
    #allocation2 [shape = 'u8[8192]{0}', space=vmem, size = 0x2000, scoped, tag = 'input window, operand 0, single buffered']
    #allocation3 [shape = 's32[1]{0}', space=sflag, size = 0x4, scoped, tag = 'scoped memory for tpu_custom_call.1']
    #allocation4 [shape = 's32[1]{0}', space=sflag, size = 0x4, scoped, tag = 'scoped memory for tpu_custom_call.1']
    #allocation5 [shape = 'u8[16384]{0}', space=vmem, size = 0x4000, scoped, tag = 'input window, operand 1, single buffered']
    #allocation6 [shape = 's32[1]{0}', space=sflag, size = 0x4, scoped, tag = 'scoped memory for tpu_custom_call.1']
    #allocation7 [shape = 'u8[8192]{0}', space=vmem, size = 0x2000, scoped, tag = 'output window, operand 0, single buffered']
    %10 = vsyncpa [#allocation3], 0
    %11 = vsyncpa [#allocation6], 0
    %12 = vsyncpa [#allocation4], 0
    // Predicated region
    $region2: #{tpu_custom_call.1} parent=1 // pred_check
      _
    $region3: #{tpu_custom_call.1} parent=1 // pred_check_branch
      %14 = sbr.rel (0) target = $region5
    $region4: #{tpu_custom_call.1} parent=1 // pred_region
      %s16 = ssub.s32 256, 256
      %17 = vsyncadd [#allocation3], %s16
      %s18 = sshll.u32 [#allocation2], 4
      %s19 = int_to_ptr.vmem [resolvable:$true] %s18
      %24 = dma.hbm_to_vmem [thread:$0]  %s0, 256, %s19, [#allocation3], 128, 128, 8
    $region5: #{tpu_custom_call.1} parent=1 // pred_fallthru
      _
    // Predicated region
    $region6: #{tpu_custom_call.1} parent=1 // pred_check
      _
    $region7: #{tpu_custom_call.1} parent=1 // pred_check_branch
      %26 = sbr.rel (0) target = $region9
    $region8: #{tpu_custom_call.1} parent=1 // pred_region
      %s28 = ssub.s32 512, 512
      %29 = vsyncadd [#allocation6], %s28
      %s30 = sshll.u32 [#allocation5], 4
      %s31 = int_to_ptr.vmem [resolvable:$true] %s30
      %36 = dma.hbm_to_vmem [thread:$0]  %s1, 512, %s31, [#allocation6], 128, 128, 8
    $region9: #{tpu_custom_call.1} parent=1 // pred_fallthru
      _
    // Predicated region
    $region10: #{tpu_custom_call.1} parent=1 // pred_check
      _
    $region11: #{tpu_custom_call.1} parent=1 // pred_check_branch
      %38 = sbr.rel (0) target = $region13
    $region12: #{tpu_custom_call.1} parent=1 // pred_region
      _
    $region13: #{tpu_custom_call.1} parent=1 // pred_fallthru
      _
    // Predicated region
    $region14: #{tpu_custom_call.1} parent=1 // pred_check
      _
    $region15: #{tpu_custom_call.1} parent=1 // pred_check_branch
      %40 = sbr.rel (0) target = $region17
    $region16: #{tpu_custom_call.1} parent=1 // pred_region
      _
    $region17: #{tpu_custom_call.1} parent=1 // pred_fallthru
      _
    // Predicated region
    $region18: #{tpu_custom_call.1} parent=1 // pred_check
      _
    $region19: #{tpu_custom_call.1} parent=1 // pred_check_branch
      %42 = sbr.rel (0) target = $region21
    $region20: #{tpu_custom_call.1} parent=1 // pred_region
      _
    $region21: #{tpu_custom_call.1} parent=1 // pred_fallthru
      _
    // Predicated region
    $region22: #{tpu_custom_call.1} parent=1 // pred_check
      _
    $region23: #{tpu_custom_call.1} parent=1 // pred_check_branch
      %44 = sbr.rel (0) target = $region25
    $region24: #{tpu_custom_call.1} parent=1 // pred_region
      %45 = dma.done [#allocation3], 256
    $region25: #{tpu_custom_call.1} parent=1 // pred_fallthru
      _
    // Predicated region
    $region26: #{tpu_custom_call.1} parent=1 // pred_check
      _
    $region27: #{tpu_custom_call.1} parent=1 // pred_check_branch
      %47 = sbr.rel (0) target = $region29
    $region28: #{tpu_custom_call.1} parent=1 // pred_region
      %48 = dma.done [#allocation6], 512
    $region29: #{tpu_custom_call.1} parent=1 // pred_fallthru
      _
    %v49 = vld [vmem:[#allocation2] sm:$0xff]
    %v50 = vld [vmem:[#allocation2 + $0x8] sm:$0xff]
    %v51 = vld [vmem:[#allocation5] sm:$0xff]
    %v52 = vld [vmem:[#allocation5 + $0x8] sm:$0xff]
    %v53 = vld [vmem:[#allocation5 + $0x10] sm:$0xff]
    %v54 = vld [vmem:[#allocation5 + $0x18] sm:$0xff]
    %v55 = vld [vmem:[%s2] sm:$0x1]
    %v57 = vlaneseq
    %v58 = vshrl.u32 %v57, 7
    %v59 = vsub.s32 0, %v58
    %v60 = vrot.slane %v55, %v59
    %vm62 = vcmask 261120
    %v64 = vsel %vm62, %v49, 0
    %v67 = vsel %vm62, %v50, 0
    %v70 = vsel %vm62, %v51, 0
    %v73 = vsel %vm62, %v52, 0
    %v76 = vsel %vm62, %v53, 0
    %v79 = vsel %vm62, %v54, 0
    %81 = vmatprep.subr.mxu0 0.0
    %82 = vmatpush1.xpose.msra.mxu0 %v70
    %83 = vmatprep.subr.mxu0 0.0
    %84 = vmatpush1.xpose.msra.mxu0 %v73
    %85 = vmatprep.subr.mxu0 0.0
    %86 = vmatpush1.xpose.msra.mxu0 %v76
    %87 = vmatprep.subr.mxu0 0.0
    %88 = vmatpush1.xpose.msra.mxu0 %v79
    %89 = vmatprep.subr.mxu0 0.0
    %90 = vmatpush1.xpose.msra.mxu0 0.0
    %91 = vmatprep.subr.mxu0 0.0
    %92 = vmatpush1.xpose.msra.mxu0 0.0
    %93 = vmatprep.subr.mxu0 0.0
    %94 = vmatpush1.xpose.msra.mxu0 0.0
    %95 = vmatprep.subr.mxu0 0.0
    %96 = vmatpush1.xpose.msra.mxu0 0.0
    %97 = vmatprep.subr.mxu0 0.0
    %98 = vmatpush1.xpose.msra.mxu0 0.0
    %99 = vmatprep.subr.mxu0 0.0
    %100 = vmatpush1.xpose.msra.mxu0 0.0
    %101 = vmatprep.subr.mxu0 0.0
    %102 = vmatpush1.xpose.msra.mxu0 0.0
    %103 = vmatprep.subr.mxu0 0.0
    %104 = vmatpush1.xpose.msra.mxu0 0.0
    %105 = vmatprep.subr.mxu0 0.0
    %106 = vmatpush1.xpose.msra.mxu0 0.0
    %107 = vmatprep.subr.mxu0 0.0
    %108 = vmatpush1.xpose.msra.mxu0 0.0
    %109 = vmatprep.subr.mxu0 0.0
    %110 = vmatpush1.xpose.msra.mxu0 0.0
    %111 = vmatprep.subr.mxu0 0.0
    %112 = vmatpush1.xpose.msra.mxu0 0.0
    %113 = vmatprep.subr.mxu0 0.0
    %114 = vmatpush1.xpose.msra.mxu0 0.0
    %115 = vmatprep.subr.mxu0 0.0
    %116 = vmatpush1.xpose.msra.mxu0 0.0
    %117 = vmatprep.subr.mxu0 0.0
    %118 = vmatpush1.xpose.msra.mxu0 0.0
    %119 = vmatprep.subr.mxu0 0.0
    %120 = vmatpush1.xpose.msra.mxu0 0.0
    %121 = vmatprep.subr.mxu0 0.0
    %122 = vmatpush1.xpose.msra.mxu0 0.0
    %123 = vmatprep.subr.mxu0 0.0
    %124 = vmatpush1.xpose.msra.mxu0 0.0
    %125 = vmatprep.subr.mxu0 0.0
    %126 = vmatpush1.xpose.msra.mxu0 0.0
    %127 = vmatprep.subr.mxu0 0.0
    %128 = vmatpush1.xpose.msra.mxu0 0.0
    %129 = vmatprep.subr.mxu0 0.0
    %130 = vmatpush1.xpose.msra.mxu0 0.0
    %131 = vmatprep.subr.mxu0 0.0
    %132 = vmatpush1.xpose.msra.mxu0 0.0
    %133 = vmatprep.subr.mxu0 0.0
    %134 = vmatpush1.xpose.msra.mxu0 0.0
    %135 = vmatprep.subr.mxu0 0.0
    %136 = vmatpush1.xpose.msra.mxu0 0.0
    %137 = vmatprep.subr.mxu0 0.0
    %138 = vmatpush1.xpose.msra.mxu0 0.0
    %139 = vmatprep.subr.mxu0 0.0
    %140 = vmatpush1.xpose.msra.mxu0 0.0
    %141 = vmatprep.subr.mxu0 0.0
    %142 = vmatpush1.xpose.msra.mxu0 0.0
    %143 = vmatprep.subr.mxu0 0.0
    %144 = vmatpush1.xpose.msra.mxu0 0.0
    %145 = vmatprep.mubr.f32.mxu0 0.0
    %146 = vmatmul.mubr.f32.gmra.mrb[0].mxu0 %v64
    %v147 = vpop.f32.mrb[0].mxu0
    %v148 = vadd.f32 %v60, %v147
    %v149 = vpop.f32.mrb[0].mxu0
    %150 = vmatprep.mubr.f32.mxu0 0.0
    %151 = vmatmul.mubr.f32.gmra.mrb[0].mxu0 %v67
    %v152 = vpop.f32.mrb[0].mxu0
    %v153 = vadd.f32 %v60, %v152
    %v154 = vpop.f32.mrb[0].mxu0
    %155 = vdwg.mxu0
    %v156 = vmul.f32 %v148, 0.5
    %v157 = vmul.f32 %v153, 0.5
    %v158 = vmul.f32 %v148, 0.70710677
    %v159 = vmul.f32 %v153, 0.70710677
    %v160 = verf.f32.pop %v158
    %v161 = verf.f32.pop %v159
    %v162 = vadd.f32 %v160, 1.0
    %v163 = vadd.f32 %v161, 1.0
    %v164 = vmul.f32 %v156, %v162
    %v165 = vmul.f32 %v157, %v163
    %v166 = vsel %vm62, %v164, 0.0
    %167 = vadd.xlane.f32.xlu0 %v166
    %v168 = vpop.xlane.xlu0 %167
    %v169 = vsel %vm62, %v165, 0.0
    %170 = vadd.xlane.f32.xlu0 %v169
    %v171 = vpop.xlane.xlu0 %170
    %v172 = vrcp.pop 32.0
    %v173 = vmul.f32 %v168, %v172
    %v174 = vmul.f32 %v171, %v172
    %v175 = vsub.f32 %v164, %v173
    %v176 = vsub.f32 %v165, %v174
    %v177 = vmul.f32 %v175, %v175
    %v178 = vmul.f32 %v176, %v176
    %v179 = vsel %vm62, %v177, 0.0
    %180 = vadd.xlane.f32.xlu0 %v179
    %v181 = vpop.xlane.xlu0 %180
    %v182 = vsel %vm62, %v178, 0.0
    %183 = vadd.xlane.f32.xlu0 %v182
    %v184 = vpop.xlane.xlu0 %183
    %v185 = vmul.f32 %v181, %v172
    %v186 = vmul.f32 %v184, %v172
    %v187 = vadd.f32 %v185, 1e-12
    %v188 = vadd.f32 %v186, 1e-12
    %v189 = vrsqrt.pop %v187
    %v190 = vrsqrt.pop %v188
    %v191 = vmul.f32 %v175, %v189
    %v192 = vmul.f32 %v176, %v190
    %v193 = vld [vmem:[%s3] sm:$0x1]
    %v195 = vlaneseq
    %v196 = vshrl.u32 %v195, 7
    %v197 = vsub.s32 0, %v196
    %v198 = vrot.slane %v193, %v197
    %v200 = vmul.f32 %v191, %v198
    %v201 = vmul.f32 %v192, %v198
    %v202 = vld [vmem:[%s4] sm:$0x1]
    %v204 = vlaneseq
    %v205 = vshrl.u32 %v204, 7
    %v206 = vsub.s32 0, %v205
    %v207 = vrot.slane %v202, %v206
    %v209 = vadd.f32 %v200, %v207
    %v210 = vadd.f32 %v201, %v207
    %211 = vst.msk [vmem:[#allocation7] sm:$0xff] %vm62, %v209
    %212 = vst.msk [vmem:[#allocation7 + $0x8] sm:$0xff] %vm62, %v210
    // Predicated region
    $region30: #{tpu_custom_call.1} parent=1 // pred_check
      _
    $region31: #{tpu_custom_call.1} parent=1 // pred_check_branch
      %214 = sbr.rel (0) target = $region33
    $region32: #{tpu_custom_call.1} parent=1 // pred_region
      %s216 = ssub.s32 256, 256
      %217 = vsyncadd [#allocation4], %s216
      %s218 = sshll.u32 [#allocation7], 4
      %s219 = int_to_ptr.vmem [resolvable:$true] %s218
      %224 = dma.vmem_to_hbm [thread:$0]  %s219, 256, %s5, [#allocation4], 128, 128, 8
    $region33: #{tpu_custom_call.1} parent=1 // pred_fallthru
      _
    // Predicated region
    $region34: #{tpu_custom_call.1} parent=1 // pred_check
      _
    $region35: #{tpu_custom_call.1} parent=1 // pred_check_branch
      %226 = sbr.rel (0) target = $region37
    $region36: #{tpu_custom_call.1} parent=1 // pred_region
      %227 = dma.done [#allocation4], 256
    $region37: #{tpu_custom_call.1} parent=1 // pred_fallthru
      _
    %228 = vsyncpa [#allocation3], 1
    %229 = vsyncpa [#allocation6], 1
    %230 = vsyncpa [#allocation4], 1

</llo_original>
